<compile_context>
chip_gen: v7x
topology: tpu7x:2x2x1
jax: 0.10.0
libtpu: 0.0.40
codegen_flags: <defaults>
</compile_context>

<pallas_src>
import functools

import jax
import jax.numpy as jnp
from jax.experimental import pallas as pl
from jax.experimental.pallas import tpu as pltpu

_LANE = 128


def _elementwise_kernel(x_ref, o_ref):
    x = x_ref[...].astype(jnp.float32)
    # ((x + 2) * 3 - 1) * 0.25 + 1  == ((((x+2)*3)-1)/4) + 0 + 1  (bit-exact)
    y = ((x + 2.0) * 3.0 - 1.0) * 0.25 + 1.0
    o_ref[...] = y.astype(o_ref.dtype)


@functools.partial(jax.jit)
def pt_module_forward(x):
    """Elementwise forward of PtModule. Any shape / float dtype."""
    orig_shape = x.shape
    orig_dtype = x.dtype
    n = x.size

    # Lane-dense column width: large multiple of 128 when the tensor allows it.
    cols = 512 if n >= 512 else _LANE

    # Row tiling: target ~512 rows per tile (512x512 f32 = 1 MiB/block).
    rows_needed = pl.cdiv(n, cols)
    if rows_needed >= 8:
        tr = min(512, (rows_needed // 8) * 8)   # multiple of 8 (f32 sublane)
        rows = pl.cdiv(rows_needed, tr) * tr
    else:
        tr = rows_needed                        # block == full dim -> allowed
        rows = rows_needed

    pad = rows * cols - n
    flat = x.reshape(-1)
    if pad:
        flat = jnp.pad(flat, (0, pad))
    x2d = flat.reshape(rows, cols)

    grid = (rows // tr,)

    out2d = pl.pallas_call(
        _elementwise_kernel,
        out_shape=jax.ShapeDtypeStruct((rows, cols), orig_dtype),
        grid_spec=pltpu.PrefetchScalarGridSpec(
            num_scalar_prefetch=0,
            grid=grid,
            in_specs=[pl.BlockSpec((tr, cols), lambda i: (i, 0))],
            out_specs=pl.BlockSpec((tr, cols), lambda i: (i, 0)),
        ),
        compiler_params=pltpu.CompilerParams(
            dimension_semantics=("parallel",),
        ),
        input_output_aliases={0: 0},
    )(x2d)

    return out2d.reshape(-1)[:n].reshape(orig_shape)


if __name__ == "__main__":
    key = jax.random.PRNGKey(0)
    # small NCHW input consistent with the module (pure elementwise)
    x = jax.random.normal(key, (2, 4, 16, 16), dtype=jnp.float32)

    out = pt_module_forward(x)
    out = jax.block_until_ready(out)

    # reference check in plain JAX (original op chain)
    ref = ((((x + 2.0) * 3.0) - 1.0) / 4.0) + 0.0 + 1.0
    assert out.shape == x.shape
    assert out.dtype == x.dtype
    assert jnp.allclose(out, ref, atol=1e-6), "mismatch vs reference"

    print("KERNEL_OK")
</pallas_src>

<mosaic_0001>
module attributes {stable_mosaic.version = 11 : i64} {
  func.func @_elementwise_kernel(%arg0: i32, %arg1: memref<4x512xf32, #tpu.memory_space<vmem>>, %arg2: memref<4x512xf32, #tpu.memory_space<vmem>>) attributes {dimension_semantics = [#tpu.dimension_semantics<parallel>], iteration_bounds = array<i64: 1>, scalar_prefetch = 0 : i64, scratch_operands = 0 : i64, tpu.core_type = #tpu.core_type<tc>, window_params = [{transform_indices = @transform_0, window_bounds = array<i64: 4, 512>}, {transform_indices = @transform_1, window_bounds = array<i64: 4, 512>}]} {
    %c0 = arith.constant 0 : index
    %c0_0 = arith.constant 0 : index
    %0 = vector.load %arg1[%c0, %c0_0] : memref<4x512xf32, #tpu.memory_space<vmem>>, vector<4x512xf32>
    %cst = arith.constant 2.000000e+00 : f32
    %1 = vector.broadcast %cst : f32 to vector<4x512xf32>
    %2 = arith.addf %0, %1 : vector<4x512xf32>
    %cst_1 = arith.constant 3.000000e+00 : f32
    %3 = vector.broadcast %cst_1 : f32 to vector<4x512xf32>
    %4 = arith.mulf %2, %3 : vector<4x512xf32>
    %cst_2 = arith.constant 1.000000e+00 : f32
    %5 = vector.broadcast %cst_2 : f32 to vector<4x512xf32>
    %6 = arith.subf %4, %5 : vector<4x512xf32>
    %cst_3 = arith.constant 2.500000e-01 : f32
    %7 = vector.broadcast %cst_3 : f32 to vector<4x512xf32>
    %8 = arith.mulf %6, %7 : vector<4x512xf32>
    %cst_4 = arith.constant 1.000000e+00 : f32
    %9 = vector.broadcast %cst_4 : f32 to vector<4x512xf32>
    %10 = arith.addf %8, %9 : vector<4x512xf32>
    %c0_5 = arith.constant 0 : index
    %c0_6 = arith.constant 0 : index
    %11 = vector.load %arg2[%c0_5, %c0_6] : memref<4x512xf32, #tpu.memory_space<vmem>>, vector<4x512xf32>
    tpu.vector_store %arg2[%c0_5, %c0_6], %10 {strides = array<i32>} : memref<4x512xf32, #tpu.memory_space<vmem>>, vector<4x512xf32>,
    return
  }
  func.func @transform_0(%arg0: i32) -> (i32, i32) {
    %c0_i32 = arith.constant 0 : i32
    %c0_i32_0 = arith.constant 0 : i32
    return %arg0, %c0_i32 : i32, i32
  }
  func.func @transform_1(%arg0: i32) -> (i32, i32) {
    %c0_i32 = arith.constant 0 : i32
    %c0_i32_0 = arith.constant 0 : i32
    return %arg0, %c0_i32 : i32, i32
  }
}

</mosaic_0001>

<llo_original>
// kernel: pt_module_forward.1
$region0: #{pt_module_forward.1}
  #allocation0 [shape = 'u32[]', space=smem, size = 0x4, offset = 0x4, fixed_abs, tag = 'smem constant byte address 0x4 - core index']
  #allocation1 [shape = 'u32[144,128]{1,0:T(1,128)}', space=vmem, size = 0x12000, scoped, tag = 'internal scratch']
  %s0 = inlined_call_operand.vmem [shape: f32[4,512], index: 0, kind: input, shape index: {}, may-alias: {0,1}]
  %s1 = inlined_call_operand.vmem [shape: f32[4,512], index: 1, kind: output, shape index: {}, may-alias: {0,1}]
  %s2 = sld [smem:[#allocation0]]
  $region14: #{pt_module_forward.1} parent=0
    _
  %s4 = ssub.s32 1, %s2
  %s5 = scalar_select 0, %s4, %s2
  // Predicated region
  $region2: #{pt_module_forward.1} parent=0 // pred_check
    _
  $region3: #{pt_module_forward.1} parent=0 // pred_check_branch
    %7 = sbr.rel (0) target = $region5
  $region4: #{pt_module_forward.1} parent=0 // pred_region
    _
  $region5: #{pt_module_forward.1} parent=0 // pred_fallthru
    _
  %v8 = vld [vmem:[%s0] sm:$0xff]
  %v9 = vld [vmem:[%s0 + $0x8] sm:$0xff]
  %v10 = vadd.f32 %v8, 2.0
  %v11 = vadd.f32 %v9, 2.0
  %v12 = vmul.f32 %v10, 3.0
  %v13 = vmul.f32 %v11, 3.0
  %v14 = vsub.f32 %v12, 1.0
  %v15 = vsub.f32 %v13, 1.0
  %v16 = vmul.f32 %v14, 0.25
  %v17 = vmul.f32 %v15, 0.25
  %v18 = vadd.f32 %v16, 1.0
  %v19 = vadd.f32 %v17, 1.0
  %20 = vst [vmem:[%s1] sm:$0xff] %v18
  %21 = vst [vmem:[%s1 + $0x8] sm:$0xff] %v19
  // Predicated region
  $region6: #{pt_module_forward.1} parent=0 // pred_check
    _
  $region7: #{pt_module_forward.1} parent=0 // pred_check_branch
    %23 = sbr.rel (0) target = $region9
  $region8: #{pt_module_forward.1} parent=0 // pred_region
    _
  $region9: #{pt_module_forward.1} parent=0 // pred_fallthru
    _
  // Predicated region
  $region10: #{pt_module_forward.1} parent=0 // pred_check
    _
  $region11: #{pt_module_forward.1} parent=0 // pred_check_branch
    %25 = sbr.rel (0) target = $region13
  $region12: #{pt_module_forward.1} parent=0 // pred_region
    _
  $region13: #{pt_module_forward.1} parent=0 // pred_fallthru
    _

</llo_original>
